<compile_context>
chip_gen: v7x
topology: tpu7x:2x2x1
jax: 0.10.0
libtpu: 0.0.40
codegen_flags: <defaults>
</compile_context>

<pallas_src>
import functools

import jax
import jax.numpy as jnp
from jax import lax
from jax.experimental import pallas as pl
from jax.experimental.pallas import tpu as pltpu


# --------------------- Kernel 1: highway + LSTM input projection -------------

def _highway_proj_kernel(x_ref, w1_ref, b1_ref, w2_ref, b2_ref, wx_ref, bx_ref,
                         gx_ref, *, mm_dtype):
    D = x_ref.shape[-1]
    G4 = gx_ref.shape[-1]                          # 4H
    h = x_ref[...].astype(jnp.float32)             # (rows, D), time-major rows

    # Two highway layers; flow + gate Linears fused into one (D, 2D) matmul each.
    for w_ref, b_ref in ((w1_ref, b1_ref), (w2_ref, b2_ref)):
        z = jnp.dot(h.astype(mm_dtype), w_ref[...],
                    preferred_element_type=jnp.float32) + b_ref[...]
        flow = jnp.maximum(z[:, :D], 0.0)          # relu(flow_layer(x))
        gate = jax.nn.sigmoid(z[:, D:])            # sigmoid(gate_layer(x))
        h = gate * flow + (1.0 - gate) * h

    # Fused LSTM input projection for BOTH directions: one (rows, D) @ (D, 8H).
    gx = jnp.dot(h.astype(mm_dtype), wx_ref[...],
                 preferred_element_type=jnp.float32) + bx_ref[...]
    # Direction-major pre-activations, stored in the (possibly bf16) gx dtype.
    gx_ref[0] = gx[:, :G4].astype(gx_ref.dtype)    # forward-direction gates
    gx_ref[1] = gx[:, G4:].astype(gx_ref.dtype)    # backward-direction gates


def highway_input_projection(x2d, packed, hidden_dim, *, T_pad, B, tt,
                             matmul_dtype, gx_dtype):
    H = hidden_dim
    D = x2d.shape[-1]
    n1 = T_pad // tt                               # tt divides T_pad

    resident = pl.BlockSpec(memory_space=pltpu.MemorySpace.VMEM)
    kern = functools.partial(_highway_proj_kernel, mm_dtype=matmul_dtype)

    gx = pl.pallas_call(
        kern,
        grid=(n1,),
        in_specs=[
            pl.BlockSpec((tt * B, D), lambda i: (i, 0)),
            resident, resident, resident, resident, resident, resident,
        ],
        out_specs=pl.BlockSpec((2, tt * B, 4 * H), lambda i: (0, i, 0)),
        out_shape=jax.ShapeDtypeStruct((2, T_pad * B, 4 * H), gx_dtype),
        compiler_params=pltpu.CompilerParams(
            dimension_semantics=("parallel",)),
    )(x2d, packed["w1"], packed["b1"], packed["w2"], packed["b2"],
      packed["wx"], packed["bx"])
    return gx


# --------------------- Kernel 2: BiLSTM recurrence ----------------------------

def _bilstm_kernel(gx_ref, whh_ref, out_ref, h_scr, c_scr, *,
                   hidden_dim, tc, t_real, t_pad, mm_dtype):
    H = hidden_dim
    d = pl.program_id(0)                           # 0 = forward, 1 = backward
    c = pl.program_id(1)                           # chunk along this direction

    @pl.when(c == 0)
    def _():                                       # direction start: zero state
        h_scr[...] = jnp.zeros_like(h_scr)
        c_scr[...] = jnp.zeros_like(c_scr)

    whh = whh_ref[...]                             # (H, 4H) for this direction
    mask_padding = (t_pad != t_real)               # static

    def step(j, carry):
        h_prev, c_prev = carry
        # Row inside the time block: fwd walks forward, bwd walks backward.
        r = (1 - d) * j + d * (tc - 1 - j)
        gates = gx_ref[r].astype(jnp.float32) + jnp.dot(
            h_prev.astype(mm_dtype), whh, preferred_element_type=jnp.float32)
        # PyTorch gate order: i, f, g, o.  Gate math kept in f32.
        i_g = jax.nn.sigmoid(gates[:, 0 * H:1 * H])
        f_g = jax.nn.sigmoid(gates[:, 1 * H:2 * H])
        g_g = jnp.tanh(gates[:, 2 * H:3 * H])
        o_g = jax.nn.sigmoid(gates[:, 3 * H:4 * H])
        c_new = f_g * c_prev + i_g * g_g
        h_new = o_g * jnp.tanh(c_new)
        if mask_padding:
            s = c * tc + j                         # scan step of this direction
            t = (1 - d) * s + d * (t_pad - 1 - s)  # global timestep
            m = (t < t_real).astype(jnp.float32)   # 1.0 for real steps
            h_new = h_prev + m * (h_new - h_prev)
            c_new = c_prev + m * (c_new - c_prev)
        out_ref[r] = h_new.astype(out_ref.dtype)
        return (h_new, c_new)

    # State lives in the loop carry (vregs); scratch only for cross-chunk carry.
    h_fin, c_fin = lax.fori_loop(0, tc, step, (h_scr[...], c_scr[...]),
                                 unroll=True)
    h_scr[...] = h_fin
    c_scr[...] = c_fin


def bilstm_recurrence(gx4, whh, hidden_dim, *, T_real, time_chunk, matmul_dtype):
    _, T_pad, B, _ = gx4.shape
    H = hidden_dim
    tc = time_chunk
    nch = T_pad // tc

    def _tb(d, c):                                 # time-block for (dir, chunk)
        return (1 - d) * c + d * (nch - 1 - c)

    kern = functools.partial(_bilstm_kernel, hidden_dim=H, tc=tc,
                             t_real=T_real, t_pad=T_pad, mm_dtype=matmul_dtype)

    # TODO(synk): with H % 128 == 0, emit a single lane-dense (B, T, 2H) output
    # and drop the wrapper transpose; with 2 TensorCores (v7x) mark the
    # direction axis CORE_PARALLEL with per-core state.
    out = pl.pallas_call(
        kern,
        grid=(2, nch),
        in_specs=[
            pl.BlockSpec((None, tc, B, 4 * H),
                         lambda d, c: (d, _tb(d, c), 0, 0)),
            pl.BlockSpec((None, H, 4 * H), lambda d, c: (d, 0, 0)),
        ],
        out_specs=pl.BlockSpec((None, tc, B, H),
                               lambda d, c: (d, _tb(d, c), 0, 0)),
        out_shape=jax.ShapeDtypeStruct((2, T_pad, B, H), jnp.float32),
        scratch_shapes=[
            pltpu.VMEM((B, H), jnp.float32),       # hidden state carry
            pltpu.VMEM((B, H), jnp.float32),       # cell   state carry
        ],
        compiler_params=pltpu.CompilerParams(
            dimension_semantics=("arbitrary", "arbitrary")),
    )(gx4, whh)
    return out


# --------------------- Parameter packing & full forward -----------------------

def pack_params(hw_params, lstm_params, hidden_dim, matmul_dtype=jnp.bfloat16):
    """Pre-fuse PyTorch-layout parameters into kernel-ready matrices."""
    (wf1, bf1, wg1, bg1), (wf2, bf2, wg2, bg2) = hw_params
    (wih_f, whh_f, bih_f, bhh_f), (wih_b, whh_b, bih_b, bhh_b) = lstm_params
    D = wf1.shape[0]
    H = hidden_dim

    # Highway: y = x @ W.T + b ; fuse flow|gate column-wise -> one (D, 2D) dot.
    w1 = jnp.concatenate([wf1.T, wg1.T], axis=1).astype(matmul_dtype)
    b1 = jnp.concatenate([bf1, bg1]).reshape(1, 2 * D).astype(jnp.float32)
    w2 = jnp.concatenate([wf2.T, wg2.T], axis=1).astype(matmul_dtype)
    b2 = jnp.concatenate([bf2, bg2]).reshape(1, 2 * D).astype(jnp.float32)

    # LSTM input projection, both directions fused -> (D, 8H); bias = bih + bhh.
    wx = jnp.concatenate([wih_f.T, wih_b.T], axis=1).astype(matmul_dtype)
    bx = jnp.concatenate([bih_f + bhh_f, bih_b + bhh_b]
                         ).reshape(1, 8 * H).astype(jnp.float32)

    # Recurrent weights per direction (no zero-padded block-diagonal): (2, H, 4H).
    whh = jnp.stack([whh_f.T, whh_b.T], axis=0).astype(matmul_dtype)

    return dict(w1=w1, b1=b1, w2=w2, b2=b2, wx=wx, bx=bx, whh=whh)


def _round_up(x, m):
    return ((x + m - 1) // m) * m


def _largest_divisor_at_most(n, cap):
    cap = max(1, min(n, cap))
    for k in range(cap, 0, -1):
        if n % k == 0:
            return k
    return 1


def _choose_time_chunk(T, requested=None):
    tc = 32 if requested is None else max(1, int(requested))
    tc = _round_up(tc, 8)                # keep time tiles sublane friendly
    tc = min(tc, _round_up(T, 8))        # don't chunk far past the sequence
    return tc


def contextual_embedding_forward(x, packed, hidden_dim, *,
                                 matmul_dtype=jnp.bfloat16,
                                 time_chunk=None, row_target=256):
    B, T, D = x.shape
    H = hidden_dim
    tc = _choose_time_chunk(T, time_chunk)
    T_pad = _round_up(T, tc)
    nch = T_pad // tc

    # Time-major, zero-padded slab (T_pad*B, D).
    # TODO(synk): fold this transpose/pad into kernel 1 (in-kernel (B,tt)<->(tt,B)
    # transpose) to save one HBM pass over x.
    x_tm = jnp.transpose(x, (1, 0, 2))
    if T_pad != T:
        x_tm = jnp.pad(x_tm, ((0, T_pad - T), (0, 0), (0, 0)))
    x2d = x_tm.reshape(T_pad * B, D)

    # Kernel-1 time tile: multiple of tc dividing T_pad, ~row_target rows/step.
    # TODO(synk): make row_target / vmem_limit_bytes generation-aware (v7x has
    # half the VMEM of v5e/v6e) for large D, H.
    k = _largest_divisor_at_most(nch, max(1, row_target // max(1, B * tc)))
    tt = k * tc

    gx = highway_input_projection(
        x2d, packed, H, T_pad=T_pad, B=B, tt=tt,
        matmul_dtype=matmul_dtype, gx_dtype=matmul_dtype)
    # Free (contiguity-preserving) view for kernel 2's aligned per-step reads.
    gx4 = gx.reshape(2, T_pad, B, 4 * H)

    out = bilstm_recurrence(gx4, packed["whh"], H, T_real=T,
                            time_chunk=tc, matmul_dtype=matmul_dtype)

    # (2, T_pad, B, H) -> (B, T, 2H); fwd in [..., :H], bwd in [..., H:].
    out = jnp.transpose(out, (2, 1, 0, 3)).reshape(B, T_pad, 2 * H)
    return out[:, :T]


# --------------------- Params & pure-JAX reference ----------------------------

def init_params(key, D, H):
    ks = jax.random.split(key, 16)

    def nrm(k, shape, scale=0.1):
        return scale * jax.random.normal(k, shape, dtype=jnp.float32)

    hw_params = (
        (nrm(ks[0], (D, D)), nrm(ks[1], (D,)), nrm(ks[2], (D, D)), nrm(ks[3], (D,))),
        (nrm(ks[4], (D, D)), nrm(ks[5], (D,)), nrm(ks[6], (D, D)), nrm(ks[7], (D,))),
    )
    lstm_params = (
        (nrm(ks[8], (4 * H, D)), nrm(ks[9], (4 * H, H)),
         nrm(ks[10], (4 * H,)), nrm(ks[11], (4 * H,))),
        (nrm(ks[12], (4 * H, D)), nrm(ks[13], (4 * H, H)),
         nrm(ks[14], (4 * H,)), nrm(ks[15], (4 * H,))),
    )
    return hw_params, lstm_params


def reference_forward(x, hw_params, lstm_params, H):
    h = x
    for wf, bf, wg, bg in hw_params:
        flow = jax.nn.relu(h @ wf.T + bf)
        gate = jax.nn.sigmoid(h @ wg.T + bg)
        h = gate * flow + (1.0 - gate) * h
    x_tbd = jnp.transpose(h, (1, 0, 2))
    B = x.shape[0]

    def run_dir(x_seq, wih, whh, bih, bhh):
        def step(carry, x_t):
            hh, cc = carry
            gates = x_t @ wih.T + bih + hh @ whh.T + bhh
            i, f, g, o = jnp.split(gates, 4, axis=-1)
            cc = jax.nn.sigmoid(f) * cc + jax.nn.sigmoid(i) * jnp.tanh(g)
            hh = jax.nn.sigmoid(o) * jnp.tanh(cc)
            return (hh, cc), hh
        init = (jnp.zeros((B, H), jnp.float32), jnp.zeros((B, H), jnp.float32))
        _, hs = lax.scan(step, init, x_seq)
        return hs

    (wih_f, whh_f, bih_f, bhh_f), (wih_b, whh_b, bih_b, bhh_b) = lstm_params
    out_f = run_dir(x_tbd, wih_f, whh_f, bih_f, bhh_f)
    out_b = run_dir(x_tbd[::-1], wih_b, whh_b, bih_b, bhh_b)[::-1]
    out = jnp.concatenate([out_f, out_b], axis=-1)
    return jnp.transpose(out, (1, 0, 2))


if __name__ == "__main__":
    B, T, D, H = 2, 12, 32, 16   # batch, seq, input_dim, hidden_dim (T % 8 != 0
                                 # so the padding/mask path is exercised)

    key = jax.random.PRNGKey(0)
    k_x, k_p = jax.random.split(key)
    x = jax.random.normal(k_x, (B, T, D), dtype=jnp.float32)
    hw_params, lstm_params = init_params(k_p, D, H)
    ref = reference_forward(x, hw_params, lstm_params, H)

    # f32 path, explicit chunk of 8: multi-chunk state carry + T padding mask.
    packed_f32 = pack_params(hw_params, lstm_params, H, matmul_dtype=jnp.float32)
    out = contextual_embedding_forward(x, packed_f32, H,
                                       matmul_dtype=jnp.float32, time_chunk=8)
    out = jax.block_until_ready(out)
    assert out.shape == (B, T, 2 * H), out.shape
    err = float(jnp.max(jnp.abs(out - ref)))
    assert err < 2e-3, f"f32 path max abs err = {err}"

    # bf16 operand + bf16 gx path (MXU bf16 is native on v5e/v6e/v7x), default
    # chunking (single chunk, mask active).
    packed_bf16 = pack_params(hw_params, lstm_params, H,
                              matmul_dtype=jnp.bfloat16)
    out_bf16 = contextual_embedding_forward(x, packed_bf16, H,
                                            matmul_dtype=jnp.bfloat16)
    out_bf16 = jax.block_until_ready(out_bf16)
    err_bf16 = float(jnp.max(jnp.abs(out_bf16 - ref)))
    assert err_bf16 < 0.1, f"bf16 path max abs err = {err_bf16}"

    print("KERNEL_OK")
</pallas_src>

<mosaic_0001>
module attributes {stable_mosaic.version = 11 : i64} {
  func.func @_highway_proj_kernel(%arg0: i32, %arg1: memref<32x32xf32, #tpu.memory_space<vmem>>, %arg2: memref<32x64xf32, #tpu.memory_space<vmem>>, %arg3: memref<1x64xf32, #tpu.memory_space<vmem>>, %arg4: memref<32x64xf32, #tpu.memory_space<vmem>>, %arg5: memref<1x64xf32, #tpu.memory_space<vmem>>, %arg6: memref<32x128xf32, #tpu.memory_space<vmem>>, %arg7: memref<1x128xf32, #tpu.memory_space<vmem>>, %arg8: memref<2x32x64xf32, #tpu.memory_space<vmem>>) attributes {dimension_semantics = [#tpu.dimension_semantics<parallel>], iteration_bounds = array<i64: 1>, scalar_prefetch = 0 : i64, scratch_operands = 0 : i64, tpu.core_type = #tpu.core_type<tc>, window_params = [{transform_indices = @transform_0, window_bounds = array<i64: 32, 32>}, {pipeline_mode = #tpu.pipeline_mode<synchronous>, transform_indices = @transform_1, window_bounds = array<i64: 32, 64>}, {pipeline_mode = #tpu.pipeline_mode<synchronous>, transform_indices = @transform_2, window_bounds = array<i64: 1, 64>}, {pipeline_mode = #tpu.pipeline_mode<synchronous>, transform_indices = @transform_3, window_bounds = array<i64: 32, 64>}, {pipeline_mode = #tpu.pipeline_mode<synchronous>, transform_indices = @transform_4, window_bounds = array<i64: 1, 64>}, {pipeline_mode = #tpu.pipeline_mode<synchronous>, transform_indices = @transform_5, window_bounds = array<i64: 32, 128>}, {pipeline_mode = #tpu.pipeline_mode<synchronous>, transform_indices = @transform_6, window_bounds = array<i64: 1, 128>}, {transform_indices = @transform_7, window_bounds = array<i64: 2, 32, 64>}]} {
    %c0 = arith.constant 0 : index
    %c0_0 = arith.constant 0 : index
    %0 = vector.load %arg1[%c0, %c0_0] : memref<32x32xf32, #tpu.memory_space<vmem>>, vector<32x32xf32>
    %c0_1 = arith.constant 0 : index
    %c0_2 = arith.constant 0 : index
    %1 = vector.load %arg2[%c0_1, %c0_2] : memref<32x64xf32, #tpu.memory_space<vmem>>, vector<32x64xf32>
    %cst = arith.constant dense<0.000000e+00> : vector<32x64xf32>
    %2 = tpu.matmul %0, %1, %cst {dimension_numbers = #tpu.dot_dimension_numbers<[1], [0], [0], [1], [0, 0, 1, 1], [], []>} : vector<32x32xf32>, vector<32x64xf32>, vector<32x64xf32> -> vector<32x64xf32>
    %c0_3 = arith.constant 0 : index
    %c0_4 = arith.constant 0 : index
    %3 = vector.load %arg3[%c0_3, %c0_4] : memref<1x64xf32, #tpu.memory_space<vmem>>, vector<1x64xf32>
    %4 = vector.broadcast %3 : vector<1x64xf32> to vector<32x64xf32>
    %5 = arith.addf %2, %4 : vector<32x64xf32>
    %6 = vector.extract_strided_slice %5 {offsets = [0, 0], sizes = [32, 32], strides = [1, 1]} : vector<32x64xf32> to vector<32x32xf32>
    %cst_5 = arith.constant 0.000000e+00 : f32
    %7 = vector.broadcast %cst_5 : f32 to vector<32x32xf32>
    %8 = arith.maximumf %6, %7 : vector<32x32xf32>
    %9 = vector.extract_strided_slice %5 {offsets = [0, 32], sizes = [32, 32], strides = [1, 1]} : vector<32x64xf32> to vector<32x32xf32>
    %10 = arith.negf %9 : vector<32x32xf32>
    %11 = math.exp %10 : vector<32x32xf32>
    %cst_6 = arith.constant 1.000000e+00 : f32
    %12 = vector.broadcast %cst_6 : f32 to vector<32x32xf32>
    %13 = arith.addf %12, %11 : vector<32x32xf32>
    %14 = arith.divf %12, %13 : vector<32x32xf32>
    %15 = arith.mulf %14, %8 : vector<32x32xf32>
    %cst_7 = arith.constant 1.000000e+00 : f32
    %16 = vector.broadcast %cst_7 : f32 to vector<32x32xf32>
    %17 = arith.subf %16, %14 : vector<32x32xf32>
    %18 = arith.mulf %17, %0 : vector<32x32xf32>
    %19 = arith.addf %15, %18 : vector<32x32xf32>
    %c0_8 = arith.constant 0 : index
    %c0_9 = arith.constant 0 : index
    %20 = vector.load %arg4[%c0_8, %c0_9] : memref<32x64xf32, #tpu.memory_space<vmem>>, vector<32x64xf32>
    %cst_10 = arith.constant dense<0.000000e+00> : vector<32x64xf32>
    %21 = tpu.matmul %19, %20, %cst_10 {dimension_numbers = #tpu.dot_dimension_numbers<[1], [0], [0], [1], [0, 0, 1, 1], [], []>} : vector<32x32xf32>, vector<32x64xf32>, vector<32x64xf32> -> vector<32x64xf32>
    %c0_11 = arith.constant 0 : index
    %c0_12 = arith.constant 0 : index
    %22 = vector.load %arg5[%c0_11, %c0_12] : memref<1x64xf32, #tpu.memory_space<vmem>>, vector<1x64xf32>
    %23 = vector.broadcast %22 : vector<1x64xf32> to vector<32x64xf32>
    %24 = arith.addf %21, %23 : vector<32x64xf32>
    %25 = vector.extract_strided_slice %24 {offsets = [0, 0], sizes = [32, 32], strides = [1, 1]} : vector<32x64xf32> to vector<32x32xf32>
    %cst_13 = arith.constant 0.000000e+00 : f32
    %26 = vector.broadcast %cst_13 : f32 to vector<32x32xf32>
    %27 = arith.maximumf %25, %26 : vector<32x32xf32>
    %28 = vector.extract_strided_slice %24 {offsets = [0, 32], sizes = [32, 32], strides = [1, 1]} : vector<32x64xf32> to vector<32x32xf32>
    %29 = arith.negf %28 : vector<32x32xf32>
    %30 = math.exp %29 : vector<32x32xf32>
    %cst_14 = arith.constant 1.000000e+00 : f32
    %31 = vector.broadcast %cst_14 : f32 to vector<32x32xf32>
    %32 = arith.addf %31, %30 : vector<32x32xf32>
    %33 = arith.divf %31, %32 : vector<32x32xf32>
    %34 = arith.mulf %33, %27 : vector<32x32xf32>
    %cst_15 = arith.constant 1.000000e+00 : f32
    %35 = vector.broadcast %cst_15 : f32 to vector<32x32xf32>
    %36 = arith.subf %35, %33 : vector<32x32xf32>
    %37 = arith.mulf %36, %19 : vector<32x32xf32>
    %38 = arith.addf %34, %37 : vector<32x32xf32>
    %c0_16 = arith.constant 0 : index
    %c0_17 = arith.constant 0 : index
    %39 = vector.load %arg6[%c0_16, %c0_17] : memref<32x128xf32, #tpu.memory_space<vmem>>, vector<32x128xf32>
    %cst_18 = arith.constant dense<0.000000e+00> : vector<32x128xf32>
    %40 = tpu.matmul %38, %39, %cst_18 {dimension_numbers = #tpu.dot_dimension_numbers<[1], [0], [0], [1], [0, 0, 1, 1], [], []>} : vector<32x32xf32>, vector<32x128xf32>, vector<32x128xf32> -> vector<32x128xf32>
    %c0_19 = arith.constant 0 : index
    %c0_20 = arith.constant 0 : index
    %41 = vector.load %arg7[%c0_19, %c0_20] : memref<1x128xf32, #tpu.memory_space<vmem>>, vector<1x128xf32>
    %42 = vector.broadcast %41 : vector<1x128xf32> to vector<32x128xf32>
    %43 = arith.addf %40, %42 : vector<32x128xf32>
    %44 = vector.extract_strided_slice %43 {offsets = [0, 0], sizes = [32, 64], strides = [1, 1]} : vector<32x128xf32> to vector<32x64xf32>
    %c0_21 = arith.constant 0 : index
    %c0_22 = arith.constant 0 : index
    %c0_23 = arith.constant 0 : index
    %45 = vector.load %arg8[%c0_21, %c0_22, %c0_23] : memref<2x32x64xf32, #tpu.memory_space<vmem>>, vector<1x32x64xf32>
    %46 = vector.shape_cast %45 : vector<1x32x64xf32> to vector<32x64xf32>
    %47 = vector.shape_cast %44 : vector<32x64xf32> to vector<1x32x64xf32>
    tpu.vector_store %arg8[%c0_21, %c0_22, %c0_23], %47 {strides = array<i32>} : memref<2x32x64xf32, #tpu.memory_space<vmem>>, vector<1x32x64xf32>,
    %48 = vector.extract_strided_slice %43 {offsets = [0, 64], sizes = [32, 64], strides = [1, 1]} : vector<32x128xf32> to vector<32x64xf32>
    %c1 = arith.constant 1 : index
    %c0_24 = arith.constant 0 : index
    %c0_25 = arith.constant 0 : index
    %49 = vector.load %arg8[%c1, %c0_24, %c0_25] : memref<2x32x64xf32, #tpu.memory_space<vmem>>, vector<1x32x64xf32>
    %50 = vector.shape_cast %49 : vector<1x32x64xf32> to vector<32x64xf32>
    %51 = vector.shape_cast %48 : vector<32x64xf32> to vector<1x32x64xf32>
    tpu.vector_store %arg8[%c1, %c0_24, %c0_25], %51 {strides = array<i32>} : memref<2x32x64xf32, #tpu.memory_space<vmem>>, vector<1x32x64xf32>,
    return
  }
  func.func @transform_0(%arg0: i32) -> (i32, i32) {
    %c0_i32 = arith.constant 0 : i32
    %c0_i32_0 = arith.constant 0 : i32
    return %arg0, %c0_i32 : i32, i32
  }
  func.func @transform_1(%arg0: i32) -> (i32, i32) {
    %c0_i32 = arith.constant 0 : i32
    %c0_i32_0 = arith.constant 0 : i32
    %c0_i32_1 = arith.constant 0 : i32
    return %c0_i32, %c0_i32_0 : i32, i32
  }
  func.func @transform_2(%arg0: i32) -> (i32, i32) {
    %c0_i32 = arith.constant 0 : i32
    %c0_i32_0 = arith.constant 0 : i32
    %c0_i32_1 = arith.constant 0 : i32
    return %c0_i32, %c0_i32_0 : i32, i32
  }
  func.func @transform_3(%arg0: i32) -> (i32, i32) {
    %c0_i32 = arith.constant 0 : i32
    %c0_i32_0 = arith.constant 0 : i32
    %c0_i32_1 = arith.constant 0 : i32
    return %c0_i32, %c0_i32_0 : i32, i32
  }
  func.func @transform_4(%arg0: i32) -> (i32, i32) {
    %c0_i32 = arith.constant 0 : i32
    %c0_i32_0 = arith.constant 0 : i32
    %c0_i32_1 = arith.constant 0 : i32
    return %c0_i32, %c0_i32_0 : i32, i32
  }
  func.func @transform_5(%arg0: i32) -> (i32, i32) {
    %c0_i32 = arith.constant 0 : i32
    %c0_i32_0 = arith.constant 0 : i32
    %c0_i32_1 = arith.constant 0 : i32
    return %c0_i32, %c0_i32_0 : i32, i32
  }
  func.func @transform_6(%arg0: i32) -> (i32, i32) {
    %c0_i32 = arith.constant 0 : i32
    %c0_i32_0 = arith.constant 0 : i32
    %c0_i32_1 = arith.constant 0 : i32
    return %c0_i32, %c0_i32_0 : i32, i32
  }
  func.func @transform_7(%arg0: i32) -> (i32, i32, i32) {
    %c0_i32 = arith.constant 0 : i32
    %c0_i32_0 = arith.constant 0 : i32
    %c0_i32_1 = arith.constant 0 : i32
    return %c0_i32, %arg0, %c0_i32_0 : i32, i32, i32
  }
}

</mosaic_0001>

<llo_original>
// kernel: tpu_custom_call.1
$region0: #{tpu_custom_call.1}
  #allocation0 [shape = 'u32[]', space=smem, size = 0x4, offset = 0x4, fixed_abs, tag = 'smem constant byte address 0x4 - core index']
  #allocation1 [shape = 'u32[144,128]{1,0:T(1,128)}', space=vmem, size = 0x12000, scoped, tag = 'internal scratch']
  %s0 = inlined_call_operand.hbm [shape: f32[32,32], index: 0, kind: input, shape index: {}]
  %s1 = inlined_call_operand.hbm [shape: f32[32,64], index: 1, kind: input, shape index: {}]
  %s2 = inlined_call_operand.vmem [shape: f32[1,64], index: 2, kind: input, shape index: {}]
  %s3 = inlined_call_operand.hbm [shape: f32[32,64], index: 3, kind: input, shape index: {}]
  %s4 = inlined_call_operand.vmem [shape: f32[1,64], index: 4, kind: input, shape index: {}]
  %s5 = inlined_call_operand.hbm [shape: f32[32,128], index: 5, kind: input, shape index: {}]
  %s6 = inlined_call_operand.vmem [shape: f32[1,128], index: 6, kind: input, shape index: {}]
  %s7 = inlined_call_operand.hbm [shape: f32[2,32,64], index: 7, kind: output, shape index: {}]
  %s8 = sld [smem:[#allocation0]]
  $region54: #{tpu_custom_call.1} parent=0
    _
  %s10 = ssub.s32 1, %s8
  %s11 = scalar_select 0, %s10, %s8
  $region1: #{tpu_custom_call.1} parent=0
    #allocation2 [shape = 'u8[16384]{0}', space=vmem, size = 0x4000, scoped, tag = 'input window, operand 0, single buffered']
    #allocation3 [shape = 's32[1]{0}', space=sflag, size = 0x4, scoped, tag = 'scoped memory for tpu_custom_call.1']
    #allocation4 [shape = 's32[1]{0}', space=sflag, size = 0x4, scoped, tag = 'scoped memory for tpu_custom_call.1']
    #allocation5 [shape = 'u8[16384]{0}', space=vmem, size = 0x4000, scoped, tag = 'input window, operand 1, single buffered']
    #allocation6 [shape = 's32[1]{0}', space=sflag, size = 0x4, scoped, tag = 'scoped memory for tpu_custom_call.1']
    #allocation7 [shape = 'u8[16384]{0}', space=vmem, size = 0x4000, scoped, tag = 'input window, operand 3, single buffered']
    #allocation8 [shape = 'u8[16384]{0}', space=vmem, size = 0x4000, scoped, tag = 'input window, operand 5, single buffered']
    #allocation9 [shape = 's32[1]{0}', space=sflag, size = 0x4, scoped, tag = 'scoped memory for tpu_custom_call.1']
    #allocation10 [shape = 'u8[32768]{0}', space=vmem, size = 0x8000, scoped, tag = 'output window, operand 0, single buffered']
    %12 = vsyncpa [#allocation3], 0
    %13 = vsyncpa [#allocation6], 0
    %14 = vsyncpa [#allocation9], 0
    %15 = vsyncpa [#allocation4], 0
    // Predicated region
    $region2: #{tpu_custom_call.1} parent=1 // pred_check
      _
    $region3: #{tpu_custom_call.1} parent=1 // pred_check_branch
      %17 = sbr.rel (0) target = $region5
    $region4: #{tpu_custom_call.1} parent=1 // pred_region
      %s19 = ssub.s32 512, 512
      %20 = vsyncadd [#allocation3], %s19
      %s21 = sshll.u32 [#allocation2], 4
      %s22 = int_to_ptr.vmem [resolvable:$true] %s21
      %27 = dma.hbm_to_vmem [thread:$0]  %s0, 512, %s22, [#allocation3], 128, 128, 8
    $region5: #{tpu_custom_call.1} parent=1 // pred_fallthru
      _
    // Predicated region
    $region6: #{tpu_custom_call.1} parent=1 // pred_check
      _
    $region7: #{tpu_custom_call.1} parent=1 // pred_check_branch
      %29 = sbr.rel (0) target = $region9
    $region8: #{tpu_custom_call.1} parent=1 // pred_region
      %s31 = ssub.s32 512, 512
      %32 = vsyncadd [#allocation6], %s31
      %s33 = sshll.u32 [#allocation5], 4
      %s34 = int_to_ptr.vmem [resolvable:$true] %s33
      %39 = dma.hbm_to_vmem [thread:$0]  %s1, 512, %s34, [#allocation6], 128, 128, 8
    $region9: #{tpu_custom_call.1} parent=1 // pred_fallthru
      _
    // Predicated region
    $region10: #{tpu_custom_call.1} parent=1 // pred_check
      _
    $region11: #{tpu_custom_call.1} parent=1 // pred_check_branch
      %41 = sbr.rel (0) target = $region13
    $region12: #{tpu_custom_call.1} parent=1 // pred_region
      _
    $region13: #{tpu_custom_call.1} parent=1 // pred_fallthru
      _
    // Predicated region
    $region14: #{tpu_custom_call.1} parent=1 // pred_check
      _
    $region15: #{tpu_custom_call.1} parent=1 // pred_check_branch
      %43 = sbr.rel (0) target = $region17
    $region16: #{tpu_custom_call.1} parent=1 // pred_region
      %s45 = ssub.s32 512, 512
      %46 = vsyncadd [#allocation6], %s45
      %s47 = sshll.u32 [#allocation7], 4
      %s48 = int_to_ptr.vmem [resolvable:$true] %s47
      %53 = dma.hbm_to_vmem [thread:$0]  %s3, 512, %s48, [#allocation6], 128, 128, 8
    $region17: #{tpu_custom_call.1} parent=1 // pred_fallthru
      _
    // Predicated region
    $region18: #{tpu_custom_call.1} parent=1 // pred_check
      _
    $region19: #{tpu_custom_call.1} parent=1 // pred_check_branch
      %55 = sbr.rel (0) target = $region21
    $region20: #{tpu_custom_call.1} parent=1 // pred_region
      _
    $region21: #{tpu_custom_call.1} parent=1 // pred_fallthru
      _
    // Predicated region
    $region22: #{tpu_custom_call.1} parent=1 // pred_check
      _
    $region23: #{tpu_custom_call.1} parent=1 // pred_check_branch
      %57 = sbr.rel (0) target = $region25
    $region24: #{tpu_custom_call.1} parent=1 // pred_region
      %s59 = ssub.s32 512, 512
      %60 = vsyncadd [#allocation9], %s59
      %s61 = sshll.u32 [#allocation8], 4
      %s62 = int_to_ptr.vmem [resolvable:$true] %s61
      %67 = dma.hbm_to_vmem [thread:$0]  %s5, 512, %s62, [#allocation9], 128, 128, 8
    $region25: #{tpu_custom_call.1} parent=1 // pred_fallthru
      _
    // Predicated region
    $region26: #{tpu_custom_call.1} parent=1 // pred_check
      _
    $region27: #{tpu_custom_call.1} parent=1 // pred_check_branch
      %69 = sbr.rel (0) target = $region29
    $region28: #{tpu_custom_call.1} parent=1 // pred_region
      _
    $region29: #{tpu_custom_call.1} parent=1 // pred_fallthru
      _
    // Predicated region
    $region30: #{tpu_custom_call.1} parent=1 // pred_check
      _
    $region31: #{tpu_custom_call.1} parent=1 // pred_check_branch
      %71 = sbr.rel (0) target = $region33
    $region32: #{tpu_custom_call.1} parent=1 // pred_region
      %72 = dma.done [#allocation3], 512
    $region33: #{tpu_custom_call.1} parent=1 // pred_fallthru
      _
    // Predicated region
    $region34: #{tpu_custom_call.1} parent=1 // pred_check
      _
    $region35: #{tpu_custom_call.1} parent=1 // pred_check_branch
      %74 = sbr.rel (0) target = $region37
    $region36: #{tpu_custom_call.1} parent=1 // pred_region
      %75 = dma.done [#allocation6], 512
    $region37: #{tpu_custom_call.1} parent=1 // pred_fallthru
      _
    // Predicated region
    $region38: #{tpu_custom_call.1} parent=1 // pred_check
      _
    $region39: #{tpu_custom_call.1} parent=1 // pred_check_branch
      %77 = sbr.rel (0) target = $region41
    $region40: #{tpu_custom_call.1} parent=1 // pred_region
      %78 = dma.done [#allocation6], 512
    $region41: #{tpu_custom_call.1} parent=1 // pred_fallthru
      _
    // Predicated region
    $region42: #{tpu_custom_call.1} parent=1 // pred_check
      _
    $region43: #{tpu_custom_call.1} parent=1 // pred_check_branch
      %80 = sbr.rel (0) target = $region45
    $region44: #{tpu_custom_call.1} parent=1 // pred_region
      %81 = dma.done [#allocation9], 512
    $region45: #{tpu_custom_call.1} parent=1 // pred_fallthru
      _
    %v82 = vld [vmem:[#allocation2] sm:$0xff]
    %v83 = vld [vmem:[#allocation2 + $0x8] sm:$0xff]
    %v84 = vld [vmem:[#allocation2 + $0x10] sm:$0xff]
    %v85 = vld [vmem:[#allocation2 + $0x18] sm:$0xff]
    %v86 = vld [vmem:[#allocation5] sm:$0xff]
    %v87 = vld [vmem:[#allocation5 + $0x8] sm:$0xff]
    %v88 = vld [vmem:[#allocation5 + $0x10] sm:$0xff]
    %v89 = vld [vmem:[#allocation5 + $0x18] sm:$0xff]
    %v90 = vld [vmem:[%s2] sm:$0x1]
    %v92 = vlaneseq
    %v93 = vshrl.u32 %v92, 7
    %v94 = vsub.s32 0, %v93
    %v95 = vrot.slane %v90, %v94
    %vm97 = vcmask 261120
    %v99 = vsel %vm97, %v82, 0
    %v102 = vsel %vm97, %v83, 0
    %v105 = vsel %vm97, %v84, 0
    %v108 = vsel %vm97, %v85, 0
    %110 = vmatprep.subr.mxu0 0.0
    %111 = vmatpush1.msra.mxu0 %v86
    %112 = vmatprep.subr.mxu0 0.0
    %113 = vmatpush1.msra.mxu0 %v87
    %114 = vmatprep.subr.mxu0 0.0
    %115 = vmatpush1.msra.mxu0 %v88
    %116 = vmatprep.subr.mxu0 0.0
    %117 = vmatpush1.msra.mxu0 %v89
    %118 = vmatprep.subr.mxu0 0.0
    %119 = vmatpush1.msra.mxu0 0.0
    %120 = vmatprep.subr.mxu0 0.0
    %121 = vmatpush1.msra.mxu0 0.0
    %122 = vmatprep.subr.mxu0 0.0
    %123 = vmatpush1.msra.mxu0 0.0
    %124 = vmatprep.subr.mxu0 0.0
    %125 = vmatpush1.msra.mxu0 0.0
    %126 = vmatprep.subr.mxu0 0.0
    %127 = vmatpush1.msra.mxu0 0.0
    %128 = vmatprep.subr.mxu0 0.0
    %129 = vmatpush1.msra.mxu0 0.0
    %130 = vmatprep.subr.mxu0 0.0
    %131 = vmatpush1.msra.mxu0 0.0
    %132 = vmatprep.subr.mxu0 0.0
    %133 = vmatpush1.msra.mxu0 0.0
    %134 = vmatprep.subr.mxu0 0.0
    %135 = vmatpush1.msra.mxu0 0.0
    %136 = vmatprep.subr.mxu0 0.0
    %137 = vmatpush1.msra.mxu0 0.0
    %138 = vmatprep.subr.mxu0 0.0
    %139 = vmatpush1.msra.mxu0 0.0
    %140 = vmatprep.subr.mxu0 0.0
    %141 = vmatpush1.msra.mxu0 0.0
    %142 = vmatprep.subr.mxu0 0.0
    %143 = vmatpush1.msra.mxu0 0.0
    %144 = vmatprep.subr.mxu0 0.0
    %145 = vmatpush1.msra.mxu0 0.0
    %146 = vmatprep.subr.mxu0 0.0
    %147 = vmatpush1.msra.mxu0 0.0
    %148 = vmatprep.subr.mxu0 0.0
    %149 = vmatpush1.msra.mxu0 0.0
    %150 = vmatprep.subr.mxu0 0.0
    %151 = vmatpush1.msra.mxu0 0.0
    %152 = vmatprep.subr.mxu0 0.0
    %153 = vmatpush1.msra.mxu0 0.0
    %154 = vmatprep.subr.mxu0 0.0
    %155 = vmatpush1.msra.mxu0 0.0
    %156 = vmatprep.subr.mxu0 0.0
    %157 = vmatpush1.msra.mxu0 0.0
    %158 = vmatprep.subr.mxu0 0.0
    %159 = vmatpush1.msra.mxu0 0.0
    %160 = vmatprep.subr.mxu0 0.0
    %161 = vmatpush1.msra.mxu0 0.0
    %162 = vmatprep.subr.mxu0 0.0
    %163 = vmatpush1.msra.mxu0 0.0
    %164 = vmatprep.subr.mxu0 0.0
    %165 = vmatpush1.msra.mxu0 0.0
    %166 = vmatprep.subr.mxu0 0.0
    %167 = vmatpush1.msra.mxu0 0.0
    %168 = vmatprep.subr.mxu0 0.0
    %169 = vmatpush1.msra.mxu0 0.0
    %170 = vmatprep.subr.mxu0 0.0
    %171 = vmatpush1.msra.mxu0 0.0
    %172 = vmatprep.subr.mxu0 0.0
    %173 = vmatpush1.msra.mxu0 0.0
    %174 = vmatprep.mubr.f32.mxu0 0.0
    %175 = vmatmul.mubr.f32.gmra.mrb[0].mxu0 %v99
    %v176 = vpop.f32.mrb[0].mxu0
    %v177 = vadd.f32 %v95, %v176
    %v178 = vpop.f32.mrb[0].mxu0
    %179 = vmatprep.mubr.f32.mxu0 0.0
    %180 = vmatmul.mubr.f32.gmra.mrb[0].mxu0 %v102
    %v181 = vpop.f32.mrb[0].mxu0
    %v182 = vadd.f32 %v95, %v181
    %v183 = vpop.f32.mrb[0].mxu0
    %184 = vmatprep.mubr.f32.mxu0 0.0
    %185 = vmatmul.mubr.f32.gmra.mrb[0].mxu0 %v105
    %v186 = vpop.f32.mrb[0].mxu0
    %v187 = vadd.f32 %v95, %v186
    %v188 = vpop.f32.mrb[0].mxu0
    %189 = vmatprep.mubr.f32.mxu0 0.0
    %190 = vmatmul.mubr.f32.gmra.mrb[0].mxu0 %v108
    %v191 = vpop.f32.mrb[0].mxu0
    %v192 = vadd.f32 %v95, %v191
    %v193 = vpop.f32.mrb[0].mxu0
    %194 = vdwg.mxu0
    %v195 = vmax.f32 %v177, 0.0
    %v196 = vmax.f32 %v182, 0.0
    %v197 = vmax.f32 %v187, 0.0
    %v198 = vmax.f32 %v192, 0.0
    %v199 = vxor.u32 %v177, 2147483648
    %v200 = vxor.u32 %v182, 2147483648
    %v201 = vxor.u32 %v187, 2147483648
    %v202 = vxor.u32 %v192, 2147483648
    %v203 = vmul.f32 %v199, 1.442695
    %v204 = vpow.pop %v203
    %v205 = vmul.f32 %v200, 1.442695
    %v206 = vpow.pop %v205
    %v207 = vmul.f32 %v201, 1.442695
    %v208 = vpow.pop %v207
    %v209 = vmul.f32 %v202, 1.442695
    %v210 = vpow.pop %v209
    %v211 = vadd.f32 %v204, 1.0
    %v212 = vadd.f32 %v206, 1.0
    %v213 = vadd.f32 %v208, 1.0
    %v214 = vadd.f32 %v210, 1.0
    %v215 = vrcp.pop %v211
    %v216 = vmul.f32 1.0, %v215
    %v217 = vrcp.pop %v212
    %v218 = vmul.f32 1.0, %v217
    %v219 = vrcp.pop %v213
    %v220 = vmul.f32 1.0, %v219
    %v221 = vrcp.pop %v214
    %v222 = vmul.f32 1.0, %v221
    %227 = vrot.lane.b32.xlu0 %v195, 32
    %v228 = vpop.permute.xlu0 %227
    %229 = vrot.lane.b32.xlu0 %v196, 32
    %v230 = vpop.permute.xlu0 %229
    %231 = vrot.lane.b32.xlu0 %v197, 32
    %v232 = vpop.permute.xlu0 %231
    %233 = vrot.lane.b32.xlu0 %v198, 32
    %v234 = vpop.permute.xlu0 %233
    %v239 = vmul.f32 %v216, %v228
    %v240 = vmul.f32 %v218, %v230
    %v241 = vmul.f32 %v220, %v232
    %v242 = vmul.f32 %v222, %v234
    %v243 = vsub.f32 1.0, %v216
    %v244 = vsub.f32 1.0, %v218
    %v245 = vsub.f32 1.0, %v220
    %v246 = vsub.f32 1.0, %v222
    %247 = vrot.lane.b32.xlu0 %v82, 32
    %v248 = vpop.permute.xlu0 %247
    %249 = vrot.lane.b32.xlu0 %v83, 32
    %v250 = vpop.permute.xlu0 %249
    %251 = vrot.lane.b32.xlu0 %v84, 32
    %v252 = vpop.permute.xlu0 %251
    %253 = vrot.lane.b32.xlu0 %v85, 32
    %v254 = vpop.permute.xlu0 %253
    %v259 = vmul.f32 %v243, %v248
    %v260 = vmul.f32 %v244, %v250
    %v261 = vmul.f32 %v245, %v252
    %v262 = vmul.f32 %v246, %v254
    %v263 = vadd.f32 %v239, %v259
    %v264 = vadd.f32 %v240, %v260
    %v265 = vadd.f32 %v241, %v261
    %v266 = vadd.f32 %v242, %v262
    %v267 = vld [vmem:[#allocation7] sm:$0xff]
    %v268 = vld [vmem:[#allocation7 + $0x8] sm:$0xff]
    %v269 = vld [vmem:[#allocation7 + $0x10] sm:$0xff]
    %v270 = vld [vmem:[#allocation7 + $0x18] sm:$0xff]
    %v271 = vld [vmem:[%s4] sm:$0x1]
    %v273 = vlaneseq
    %v274 = vshrl.u32 %v273, 7
    %v275 = vsub.s32 0, %v274
    %v276 = vrot.slane %v271, %v275
    %282 = vrot.lane.b32.xlu0 %v263, 96
    %v283 = vpop.permute.xlu0 %282
    %284 = vrot.lane.b32.xlu0 %v264, 96
    %v285 = vpop.permute.xlu0 %284
    %286 = vrot.lane.b32.xlu0 %v265, 96
    %v287 = vpop.permute.xlu0 %286
    %288 = vrot.lane.b32.xlu0 %v266, 96
    %v289 = vpop.permute.xlu0 %288
    %v290 = vsel %vm97, %v283, 0
    %v292 = vsel %vm97, %v285, 0
    %v294 = vsel %vm97, %v287, 0
    %v296 = vsel %vm97, %v289, 0
    %298 = vmatprep.subr.mxu0 0.0
    %299 = vmatpush1.msra.mxu0 %v267
    %300 = vmatprep.subr.mxu0 0.0
    %301 = vmatpush1.msra.mxu0 %v268
    %302 = vmatprep.subr.mxu0 0.0
    %303 = vmatpush1.msra.mxu0 %v269
    %304 = vmatprep.subr.mxu0 0.0
    %305 = vmatpush1.msra.mxu0 %v270
    %306 = vmatprep.subr.mxu0 0.0
    %307 = vmatpush1.msra.mxu0 0.0
    %308 = vmatprep.subr.mxu0 0.0
    %309 = vmatpush1.msra.mxu0 0.0
    %310 = vmatprep.subr.mxu0 0.0
    %311 = vmatpush1.msra.mxu0 0.0
    %312 = vmatprep.subr.mxu0 0.0
    %313 = vmatpush1.msra.mxu0 0.0
    %314 = vmatprep.subr.mxu0 0.0
    %315 = vmatpush1.msra.mxu0 0.0
    %316 = vmatprep.subr.mxu0 0.0
    %317 = vmatpush1.msra.mxu0 0.0
    %318 = vmatprep.subr.mxu0 0.0
    %319 = vmatpush1.msra.mxu0 0.0
    %320 = vmatprep.subr.mxu0 0.0
    %321 = vmatpush1.msra.mxu0 0.0
    %322 = vmatprep.subr.mxu0 0.0
    %323 = vmatpush1.msra.mxu0 0.0
    %324 = vmatprep.subr.mxu0 0.0
    %325 = vmatpush1.msra.mxu0 0.0
    %326 = vmatprep.subr.mxu0 0.0
    %327 = vmatpush1.msra.mxu0 0.0
    %328 = vmatprep.subr.mxu0 0.0
    %329 = vmatpush1.msra.mxu0 0.0
    %330 = vmatprep.subr.mxu0 0.0
    %331 = vmatpush1.msra.mxu0 0.0
    %332 = vmatprep.subr.mxu0 0.0
    %333 = vmatpush1.msra.mxu0 0.0
    %334 = vmatprep.subr.mxu0 0.0
    %335 = vmatpush1.msra.mxu0 0.0
    %336 = vmatprep.subr.mxu0 0.0
    %337 = vmatpush1.msra.mxu0 0.0
    %338 = vmatprep.subr.mxu0 0.0
    %339 = vmatpush1.msra.mxu0 0.0
    %340 = vmatprep.subr.mxu0 0.0
    %341 = vmatpush1.msra.mxu0 0.0
    %342 = vmatprep.subr.mxu0 0.0
    %343 = vmatpush1.msra.mxu0 0.0
    %344 = vmatprep.subr.mxu0 0.0
    %345 = vmatpush1.msra.mxu0 0.0
    %346 = vmatprep.subr.mxu0 0.0
    %347 = vmatpush1.msra.mxu0 0.0
    %348 = vmatprep.subr.mxu0 0.0
    %349 = vmatpush1.msra.mxu0 0.0
    %350 = vmatprep.subr.mxu0 0.0
    %351 = vmatpush1.msra.mxu0 0.0
    %352 = vmatprep.subr.mxu0 0.0
    %353 = vmatpush1.msra.mxu0 0.0
    %354 = vmatprep.subr.mxu0 0.0
    %355 = vmatpush1.msra.mxu0 0.0
    %356 = vmatprep.subr.mxu0 0.0
    %357 = vmatpush1.msra.mxu0 0.0
    %358 = vmatprep.subr.mxu0 0.0
    %359 = vmatpush1.msra.mxu0 0.0
    %360 = vmatprep.subr.mxu0 0.0
    %361 = vmatpush1.msra.mxu0 0.0
    %362 = vmatprep.mubr.f32.mxu0 0.0
    %363 = vmatmul.mubr.f32.gmra.mrb[0].mxu0 %v290
    %v364 = vpop.f32.mrb[0].mxu0
    %v365 = vadd.f32 %v276, %v364
    %v366 = vpop.f32.mrb[0].mxu0
    %367 = vmatprep.mubr.f32.mxu0 0.0
    %368 = vmatmul.mubr.f32.gmra.mrb[0].mxu0 %v292
    %v369 = vpop.f32.mrb[0].mxu0
    %v370 = vadd.f32 %v276, %v369
    %v371 = vpop.f32.mrb[0].mxu0
    %372 = vmatprep.mubr.f32.mxu0 0.0
    %373 = vmatmul.mubr.f32.gmra.mrb[0].mxu0 %v294
    %v374 = vpop.f32.mrb[0].mxu0
    %v375 = vadd.f32 %v276, %v374
    %v376 = vpop.f32.mrb[0].mxu0
    %377 = vmatprep.mubr.f32.mxu0 0.0
    %378 = vmatmul.mubr.f32.gmra.mrb[0].mxu0 %v296
    %v379 = vpop.f32.mrb[0].mxu0
    %v380 = vadd.f32 %v276, %v379
    %v381 = vpop.f32.mrb[0].mxu0
    %382 = vdwg.mxu0
    %v383 = vmax.f32 %v365, 0.0
    %v384 = vmax.f32 %v370, 0.0
    %v385 = vmax.f32 %v375, 0.0
    %v386 = vmax.f32 %v380, 0.0
    %v387 = vxor.u32 %v365, 2147483648
    %v388 = vxor.u32 %v370, 2147483648
    %v389 = vxor.u32 %v375, 2147483648
    %v390 = vxor.u32 %v380, 2147483648
    %v391 = vmul.f32 %v387, 1.442695
    %v392 = vpow.pop %v391
    %v393 = vmul.f32 %v388, 1.442695
    %v394 = vpow.pop %v393
    %v395 = vmul.f32 %v389, 1.442695
    %v396 = vpow.pop %v395
    %v397 = vmul.f32 %v390, 1.442695
    %v398 = vpow.pop %v397
    %v399 = vadd.f32 %v392, 1.0
    %v400 = vadd.f32 %v394, 1.0
    %v401 = vadd.f32 %v396, 1.0
    %v402 = vadd.f32 %v398, 1.0
    %v403 = vrcp.pop %v399
    %v404 = vmul.f32 1.0, %v403
    %v405 = vrcp.pop %v400
    %v406 = vmul.f32 1.0, %v405
    %v407 = vrcp.pop %v401
    %v408 = vmul.f32 1.0, %v407
    %v409 = vrcp.pop %v402
    %v410 = vmul.f32 1.0, %v409
    %415 = vrot.lane.b32.xlu0 %v383, 32
    %v416 = vpop.permute.xlu0 %415
    %417 = vrot.lane.b32.xlu0 %v384, 32
    %v418 = vpop.permute.xlu0 %417
    %419 = vrot.lane.b32.xlu0 %v385, 32
    %v420 = vpop.permute.xlu0 %419
    %421 = vrot.lane.b32.xlu0 %v386, 32
    %v422 = vpop.permute.xlu0 %421
    %v427 = vmul.f32 %v404, %v416
    %v428 = vmul.f32 %v406, %v418
    %v429 = vmul.f32 %v408, %v420
    %v430 = vmul.f32 %v410, %v422
    %v431 = vsub.f32 1.0, %v404
    %v432 = vsub.f32 1.0, %v406
    %v433 = vsub.f32 1.0, %v408
    %v434 = vsub.f32 1.0, %v410
    %v435 = vmul.f32 %v431, %v263
    %v436 = vmul.f32 %v432, %v264
    %v437 = vmul.f32 %v433, %v265
    %v438 = vmul.f32 %v434, %v266
    %v439 = vadd.f32 %v427, %v435
    %v440 = vadd.f32 %v428, %v436
    %v441 = vadd.f32 %v429, %v437
    %v442 = vadd.f32 %v430, %v438
    %v443 = vld [vmem:[#allocation8] sm:$0xff]
    %v444 = vld [vmem:[#allocation8 + $0x8] sm:$0xff]
    %v445 = vld [vmem:[#allocation8 + $0x10] sm:$0xff]
    %v446 = vld [vmem:[#allocation8 + $0x18] sm:$0xff]
    %v447 = vld [vmem:[%s6] sm:$0x1]
    %v449 = vlaneseq
    %v450 = vshrl.u32 %v449, 7
    %v451 = vsub.s32 0, %v450
    %v452 = vrot.slane %v447, %v451
    %458 = vrot.lane.b32.xlu0 %v439, 96
    %v459 = vpop.permute.xlu0 %458
    %460 = vrot.lane.b32.xlu0 %v440, 96
    %v461 = vpop.permute.xlu0 %460
    %462 = vrot.lane.b32.xlu0 %v441, 96
    %v463 = vpop.permute.xlu0 %462
    %464 = vrot.lane.b32.xlu0 %v442, 96
    %v465 = vpop.permute.xlu0 %464
    %v466 = vsel %vm97, %v459, 0
    %v468 = vsel %vm97, %v461, 0
    %v470 = vsel %vm97, %v463, 0
    %v472 = vsel %vm97, %v465, 0
    %474 = vmatprep.subr.mxu0 0.0
    %475 = vmatpush1.msra.mxu0 %v443
    %476 = vmatprep.subr.mxu0 0.0
    %477 = vmatpush1.msra.mxu0 %v444
    %478 = vmatprep.subr.mxu0 0.0
    %479 = vmatpush1.msra.mxu0 %v445
    %480 = vmatprep.subr.mxu0 0.0
    %481 = vmatpush1.msra.mxu0 %v446
    %482 = vmatprep.subr.mxu0 0.0
    %483 = vmatpush1.msra.mxu0 0.0
    %484 = vmatprep.subr.mxu0 0.0
    %485 = vmatpush1.msra.mxu0 0.0
    %486 = vmatprep.subr.mxu0 0.0
    %487 = vmatpush1.msra.mxu0 0.0
    %488 = vmatprep.subr.mxu0 0.0
    %489 = vmatpush1.msra.mxu0 0.0
    %490 = vmatprep.subr.mxu0 0.0
    %491 = vmatpush1.msra.mxu0 0.0
    %492 = vmatprep.subr.mxu0 0.0
    %493 = vmatpush1.msra.mxu0 0.0
    %494 = vmatprep.subr.mxu0 0.0
    %495 = vmatpush1.msra.mxu0 0.0
    %496 = vmatprep.subr.mxu0 0.0
    %497 = vmatpush1.msra.mxu0 0.0
    %498 = vmatprep.subr.mxu0 0.0
    %499 = vmatpush1.msra.mxu0 0.0
    %500 = vmatprep.subr.mxu0 0.0
    %501 = vmatpush1.msra.mxu0 0.0
    %502 = vmatprep.subr.mxu0 0.0
    %503 = vmatpush1.msra.mxu0 0.0
    %504 = vmatprep.subr.mxu0 0.0
    %505 = vmatpush1.msra.mxu0 0.0
    %506 = vmatprep.subr.mxu0 0.0
    %507 = vmatpush1.msra.mxu0 0.0
    %508 = vmatprep.subr.mxu0 0.0
    %509 = vmatpush1.msra.mxu0 0.0
    %510 = vmatprep.subr.mxu0 0.0
    %511 = vmatpush1.msra.mxu0 0.0
    %512 = vmatprep.subr.mxu0 0.0
    %513 = vmatpush1.msra.mxu0 0.0
    %514 = vmatprep.subr.mxu0 0.0
    %515 = vmatpush1.msra.mxu0 0.0
    %516 = vmatprep.subr.mxu0 0.0
    %517 = vmatpush1.msra.mxu0 0.0
    %518 = vmatprep.subr.mxu0 0.0
    %519 = vmatpush1.msra.mxu0 0.0
    %520 = vmatprep.subr.mxu0 0.0
    %521 = vmatpush1.msra.mxu0 0.0
    %522 = vmatprep.subr.mxu0 0.0
    %523 = vmatpush1.msra.mxu0 0.0
    %524 = vmatprep.subr.mxu0 0.0
    %525 = vmatpush1.msra.mxu0 0.0
    %526 = vmatprep.subr.mxu0 0.0
    %527 = vmatpush1.msra.mxu0 0.0
    %528 = vmatprep.subr.mxu0 0.0
    %529 = vmatpush1.msra.mxu0 0.0
    %530 = vmatprep.subr.mxu0 0.0
    %531 = vmatpush1.msra.mxu0 0.0
    %532 = vmatprep.subr.mxu0 0.0
    %533 = vmatpush1.msra.mxu0 0.0
    %534 = vmatprep.subr.mxu0 0.0
    %535 = vmatpush1.msra.mxu0 0.0
    %536 = vmatprep.subr.mxu0 0.0
    %537 = vmatpush1.msra.mxu0 0.0
    %538 = vmatprep.mubr.f32.mxu0 0.0
    %539 = vmatmul.mubr.f32.gmra.mrb[0].mxu0 %v466
    %v540 = vpop.f32.mrb[0].mxu0
    %v541 = vadd.f32 %v452, %v540
    %v542 = vpop.f32.mrb[0].mxu0
    %543 = vmatprep.mubr.f32.mxu0 0.0
    %544 = vmatmul.mubr.f32.gmra.mrb[0].mxu0 %v468
    %v545 = vpop.f32.mrb[0].mxu0
    %v546 = vadd.f32 %v452, %v545
    %v547 = vpop.f32.mrb[0].mxu0
    %548 = vmatprep.mubr.f32.mxu0 0.0
    %549 = vmatmul.mubr.f32.gmra.mrb[0].mxu0 %v470
    %v550 = vpop.f32.mrb[0].mxu0
    %v551 = vadd.f32 %v452, %v550
    %v552 = vpop.f32.mrb[0].mxu0
    %553 = vmatprep.mubr.f32.mxu0 0.0
    %554 = vmatmul.mubr.f32.gmra.mrb[0].mxu0 %v472
    %v555 = vpop.f32.mrb[0].mxu0
    %v556 = vadd.f32 %v452, %v555
    %v557 = vpop.f32.mrb[0].mxu0
    %558 = vdwg.mxu0
    %vm559 = vcmask 523264
    %560 = vst.msk [vmem:[#allocation10] sm:$0xff] %vm559, %v541
    %561 = vst.msk [vmem:[#allocation10 + $0x8] sm:$0xff] %vm559, %v546
    %562 = vst.msk [vmem:[#allocation10 + $0x10] sm:$0xff] %vm559, %v551
    %563 = vst.msk [vmem:[#allocation10 + $0x18] sm:$0xff] %vm559, %v556
    %568 = vrot.lane.b32.xlu0 %v541, 64
    %v569 = vpop.permute.xlu0 %568
    %570 = vrot.lane.b32.xlu0 %v546, 64
    %v571 = vpop.permute.xlu0 %570
    %572 = vrot.lane.b32.xlu0 %v551, 64
    %v573 = vpop.permute.xlu0 %572
    %574 = vrot.lane.b32.xlu0 %v556, 64
    %v575 = vpop.permute.xlu0 %574
    %s580 = scalar_lea.vmem [#allocation10], 32
    %581 = vst.msk [vmem:[%s580] sm:$0xff] %vm559, %v569
    %582 = vst.msk [vmem:[%s580 + $0x8] sm:$0xff] %vm559, %v571
    %583 = vst.msk [vmem:[%s580 + $0x10] sm:$0xff] %vm559, %v573
    %584 = vst.msk [vmem:[%s580 + $0x18] sm:$0xff] %vm559, %v575
    // Predicated region
    $region46: #{tpu_custom_call.1} parent=1 // pred_check
      _
    $region47: #{tpu_custom_call.1} parent=1 // pred_check_branch
      %586 = sbr.rel (0) target = $region49
    $region48: #{tpu_custom_call.1} parent=1 // pred_region
      %s588 = ssub.s32 1024, 1024
      %589 = vsyncadd [#allocation4], %s588
      %s590 = sshll.u32 [#allocation10], 4
      %s591 = int_to_ptr.vmem [resolvable:$true] %s590
      %596 = dma.vmem_to_hbm [thread:$0]  %s591, 1024, %s7, [#allocation4], 128, 128, 8
    $region49: #{tpu_custom_call.1} parent=1 // pred_fallthru
      _
    // Predicated region
    $region50: #{tpu_custom_call.1} parent=1 // pred_check
      _
    $region51: #{tpu_custom_call.1} parent=1 // pred_check_branch
      %598 = sbr.rel (0) target = $region53
    $region52: #{tpu_custom_call.1} parent=1 // pred_region
      %599 = dma.done [#allocation4], 1024
    $region53: #{tpu_custom_call.1} parent=1 // pred_fallthru
      _
    %600 = vsyncpa [#allocation3], 1
    %601 = vsyncpa [#allocation6], 1
    %602 = vsyncpa [#allocation9], 1
    %603 = vsyncpa [#allocation4], 1

</llo_original>
